<compile_context>
chip_gen: v7x
topology: tpu7x:2x2x1
jax: 0.10.0
libtpu: 0.0.40
codegen_flags: <defaults>
</compile_context>

<pallas_src>
import math

import numpy as np
import jax
import jax.numpy as jnp
from jax.experimental import pallas as pl
from jax.experimental.pallas import tpu as pltpu


def event_embedding_kernel(x_ref, p_ref, w_ref, o_ref):
    # x_ref: (tile_m, 2k) int32  -- cols [0:k]  = bitcast(f32 timestamps),
    #                               cols [k:2k] = type ids
    # p_ref: (2k, Kdim)   f32    -- static spread matrix        (resident)
    # w_ref: (Kdim, Hf)   f32    -- block-diag [Wt.w; table; Wt.b] (resident)
    # o_ref: (tile_m, Hf)        -- lane-dense folded output tile
    tile_m, two_k = x_ref.shape
    k = two_k // 2
    kdim = w_ref.shape[0]
    vp2 = kdim // k                       # V + 2 columns per fold slot

    x = x_ref[...]
    lane = jax.lax.broadcasted_iota(jnp.int32, (tile_m, two_k), 1)
    # First k lanes carry f32 bits, last k lanes carry small integer ids.
    vals = jnp.where(lane < k,
                     pltpu.bitcast(x, jnp.float32),
                     x.astype(jnp.float32))                       # (tile_m, 2k)

    # Spread timestamps / type ids to their slot columns with a tiny matmul:
    #   column c (slot j = c // vp2, w = c % vp2):
    #     w == 0       -> t_j
    #     1 <= w <= V  -> type_j (exact: small integers)
    #     w == V + 1   -> don't care (overwritten by the ones column below)
    spread = jnp.dot(vals, p_ref[...],
                     preferred_element_type=jnp.float32,
                     precision=jax.lax.Precision.HIGHEST)         # (tile_m, Kdim)

    within = jax.lax.broadcasted_iota(jnp.int32, (tile_m, kdim), 1) % vp2
    # NOTE: out-of-range ids produce an all-zero one-hot -> zero type embedding
    # (PyTorch nn.Embedding would raise); inputs are assumed in-range.
    onehot = (spread == (within - 1).astype(jnp.float32)).astype(jnp.float32)
    operand = jnp.where(within == 0, spread,
                        jnp.where(within == vp2 - 1, 1.0, onehot))

    # One MXU matmul does the Linear(1,H) affine AND the embedding gather:
    #   out[:, j*H:(j+1)*H] = t_j * Wt.weight + emb_table[type_j] + Wt.bias
    out = jnp.dot(operand, w_ref[...],
                  preferred_element_type=jnp.float32,
                  precision=jax.lax.Precision.HIGHEST)
    o_ref[...] = out.astype(o_ref.dtype)


def _fold_factor(h_dim, n_rows):
    """Smallest k with (k*h_dim) % 128 == 0 and n_rows % k == 0, else 1."""
    if h_dim % 128 == 0:
        return 1
    k = math.lcm(h_dim, 128) // h_dim
    if k <= 32 and n_rows % k == 0:
        return k
    return 1  # fallback: still correct, stores are lane-masked


def event_embedding(seq_t, seq_types, wt_weight, wt_bias, emb_table,
                    out_dtype=jnp.float32):
    """seq_t: (B,S) f32, seq_types: (B,S) int -> (B,S,H) out_dtype."""
    B, S = seq_t.shape
    V, H = emb_table.shape
    N = B * S

    k = _fold_factor(H, N)           # events folded per lane-dense output row
    Hf = k * H                       # output row width
    Nf = N // k                      # folded rows
    vp2 = V + 2                      # [t | one-hot over V | 1] per slot
    Kdim = k * vp2

    # --- packed input stream: one (Nf, 2k) int32 array -----------------------
    t_bits = jax.lax.bitcast_convert_type(
        seq_t.astype(jnp.float32), jnp.int32).reshape(Nf, k)
    types = seq_types.reshape(Nf, k).astype(jnp.int32)
    packed = jnp.concatenate([t_bits, types], axis=1)             # (Nf, 2k)

    # --- static spread matrix P: (2k, Kdim) ----------------------------------
    p_np = np.zeros((2 * k, Kdim), np.float32)
    for j in range(k):
        p_np[j, j * vp2] = 1.0                                # t_j -> slot col 0
        p_np[k + j, j * vp2 + 1: j * vp2 + 1 + V] = 1.0       # type_j -> one-hot cols
    p_mat = jnp.asarray(p_np)

    # --- block-diagonal combined weight: (Kdim, Hf) ---------------------------
    w_slot = jnp.concatenate(
        [wt_weight.reshape(1, H).astype(jnp.float32),
         emb_table.astype(jnp.float32),
         wt_bias.reshape(1, H).astype(jnp.float32)], axis=0)      # (vp2, H)
    w_big = jnp.kron(jnp.eye(k, dtype=jnp.float32), w_slot)       # (Kdim, Hf)

    # --- tile sizing: ~6 MiB output block, working set well under v7x VMEM ---
    out_bytes = jnp.dtype(out_dtype).itemsize
    in_lane_pad = ((2 * k + 127) // 128) * 128      # lanes the input block pads to
    target_out_block = 6 * 1024 * 1024
    tile_m = max(8, (target_out_block // (Hf * out_bytes)) // 8 * 8)
    while tile_m > 8 and 2 * tile_m * (in_lane_pad * 4 + Hf * out_bytes) > 40 * 1024 * 1024:
        tile_m = max(8, (tile_m // 2) // 8 * 8)
    if tile_m >= Nf:
        tile_m = Nf                  # single full-extent block (any row count ok)
    grid = (pl.cdiv(Nf, tile_m),)

    out = pl.pallas_call(
        event_embedding_kernel,
        out_shape=jax.ShapeDtypeStruct((Nf, Hf), out_dtype),
        grid=grid,
        in_specs=[
            pl.BlockSpec((tile_m, 2 * k), lambda i: (i, 0)),   # packed t | types
            pl.BlockSpec((2 * k, Kdim), lambda i: (0, 0)),     # spread P (resident)
            pl.BlockSpec((Kdim, Hf), lambda i: (0, 0)),        # combined W (resident)
        ],
        out_specs=pl.BlockSpec((tile_m, Hf), lambda i: (i, 0)),
        compiler_params=pltpu.CompilerParams(
            dimension_semantics=("parallel",),
            vmem_limit_bytes=48 * 1024 * 1024,
        ),
    )(packed, p_mat, w_big)

    # (Nf, k*H) row-major == (N, H) row-major: pure metadata reshape.
    return out.reshape(B, S, H)


def reference(seq_t, seq_types, wt_weight, wt_bias, emb_table):
    time_emb = seq_t[..., None] * wt_weight.reshape(1, 1, -1) + wt_bias.reshape(1, 1, -1)
    type_emb = emb_table[seq_types]
    return time_emb + type_emb


if __name__ == "__main__":
    B, S = 2, 16
    h_dim = 32
    type_dim = 10
    V = type_dim + 1

    key = jax.random.PRNGKey(0)
    k_t, k_types, k_w, k_b, k_emb = jax.random.split(key, 5)

    # Deterministic synthetic parameters (shapes from __init__).
    wt_weight = jax.random.normal(k_w, (h_dim,), dtype=jnp.float32) * 0.1   # Linear(1,h_dim).weight[:,0]
    wt_bias = jax.random.normal(k_b, (h_dim,), dtype=jnp.float32) * 0.1     # Linear(1,h_dim).bias
    emb_table = jax.random.normal(k_emb, (V, h_dim), dtype=jnp.float32) * 0.1
    emb_table = emb_table.at[type_dim].set(0.0)  # padding_idx row is zero

    # Inputs.
    seq_t = jax.random.uniform(k_t, (B, S), dtype=jnp.float32) * 5.0
    seq_types = jax.random.randint(k_types, (B, S), 0, V)  # may include padding index

    out = event_embedding(seq_t, seq_types, wt_weight, wt_bias, emb_table)
    out = jax.block_until_ready(out)

    ref = reference(seq_t, seq_types, wt_weight, wt_bias, emb_table)
    assert out.shape == (B, S, h_dim)
    # precision=HIGHEST keeps the MXU path within ~1e-6 of the f32 reference;
    # tolerance left loose enough to also cover a default-precision fallback.
    assert jnp.allclose(out, ref, atol=5e-3, rtol=5e-3)

    print("KERNEL_OK")
</pallas_src>

<mosaic_0001>
module attributes {stable_mosaic.version = 11 : i64} {
  func.func @event_embedding_kernel(%arg0: i32, %arg1: memref<8x8xi32, #tpu.memory_space<vmem>>, %arg2: memref<8x52xf32, #tpu.memory_space<vmem>>, %arg3: memref<52x128xf32, #tpu.memory_space<vmem>>, %arg4: memref<8x128xf32, #tpu.memory_space<vmem>>) attributes {dimension_semantics = [#tpu.dimension_semantics<parallel>], iteration_bounds = array<i64: 1>, scalar_prefetch = 0 : i64, scratch_operands = 0 : i64, tpu.core_type = #tpu.core_type<tc>, window_params = [{transform_indices = @transform_0, window_bounds = array<i64: 8, 8>}, {pipeline_mode = #tpu.pipeline_mode<synchronous>, transform_indices = @transform_1, window_bounds = array<i64: 8, 52>}, {pipeline_mode = #tpu.pipeline_mode<synchronous>, transform_indices = @transform_2, window_bounds = array<i64: 52, 128>}, {transform_indices = @transform_3, window_bounds = array<i64: 8, 128>}]} {
    %c0 = arith.constant 0 : index
    %c0_0 = arith.constant 0 : index
    %0 = vector.load %arg1[%c0, %c0_0] : memref<8x8xi32, #tpu.memory_space<vmem>>, vector<8x8xi32>
    %1 = tpu.iota {dimensions = array<i32: 1>} : vector<8x8xi32>
    %c4_i32 = arith.constant 4 : i32
    %2 = vector.broadcast %c4_i32 : i32 to vector<8x8xi32>
    %3 = arith.cmpi slt, %1, %2 : vector<8x8xi32>
    %4 = tpu.bitcast %0 : vector<8x8xi32> -> vector<8x8xf32>
    %5 = arith.sitofp %0 : vector<8x8xi32> to vector<8x8xf32>
    %6 = arith.select %3, %4, %5 : vector<8x8xi1>, vector<8x8xf32>
    %c0_1 = arith.constant 0 : index
    %c0_2 = arith.constant 0 : index
    %7 = vector.load %arg2[%c0_1, %c0_2] : memref<8x52xf32, #tpu.memory_space<vmem>>, vector<8x52xf32>
    %cst = arith.constant dense<0.000000e+00> : vector<8x52xf32>
    %8 = tpu.matmul %6, %7, %cst {dimension_numbers = #tpu.dot_dimension_numbers<[1], [0], [0], [1], [0, 0, 1, 1], [], []>, precision = #tpu.contract_precision<fp32>} : vector<8x8xf32>, vector<8x52xf32>, vector<8x52xf32> -> vector<8x52xf32>
    %9 = tpu.iota {dimensions = array<i32: 1>} : vector<8x52xi32>
    %c13_i32 = arith.constant 13 : i32
    %c0_i32 = arith.constant 0 : i32
    %10 = arith.cmpi eq, %c13_i32, %c0_i32 : i32
    %c1_i32 = arith.constant 1 : i32
    %11 = arith.select %10, %c1_i32, %c13_i32 : i32
    %12 = vector.broadcast %11 : i32 to vector<8x52xi32>
    %13 = arith.remsi %9, %12 : vector<8x52xi32>
    %c0_i32_3 = arith.constant 0 : i32
    %14 = vector.broadcast %c0_i32_3 : i32 to vector<8x52xi32>
    %15 = arith.cmpi ne, %13, %14 : vector<8x52xi32>
    %c0_i32_4 = arith.constant 0 : i32
    %16 = vector.broadcast %c0_i32_4 : i32 to vector<8x52xi32>
    %17 = arith.cmpi slt, %13, %16 : vector<8x52xi32>
    %c0_i32_5 = arith.constant 0 : i32
    %18 = arith.cmpi slt, %11, %c0_i32_5 : i32
    %19 = vector.broadcast %18 : i1 to vector<8x52xi1>
    %20 = vector.broadcast %19 : vector<8x52xi1> to vector<8x52xi1>
    %21 = arith.xori %17, %20 : vector<8x52xi1>
    %22 = arith.andi %21, %15 : vector<8x52xi1>
    %23 = vector.broadcast %11 : i32 to vector<8x52xi32>
    %24 = arith.addi %13, %23 : vector<8x52xi32>
    %25 = arith.select %22, %24, %13 : vector<8x52xi1>, vector<8x52xi32>
    %c1_i32_6 = arith.constant 1 : i32
    %26 = vector.broadcast %c1_i32_6 : i32 to vector<8x52xi32>
    %27 = arith.subi %25, %26 : vector<8x52xi32>
    %28 = arith.sitofp %27 : vector<8x52xi32> to vector<8x52xf32>
    %29 = arith.cmpf oeq, %8, %28 : vector<8x52xf32>
    %30 = arith.extui %29 : vector<8x52xi1> to vector<8x52xi32>
    %31 = arith.sitofp %30 : vector<8x52xi32> to vector<8x52xf32>
    %c0_i32_7 = arith.constant 0 : i32
    %32 = vector.broadcast %c0_i32_7 : i32 to vector<8x52xi32>
    %33 = arith.cmpi eq, %25, %32 : vector<8x52xi32>
    %c12_i32 = arith.constant 12 : i32
    %34 = vector.broadcast %c12_i32 : i32 to vector<8x52xi32>
    %35 = arith.cmpi eq, %25, %34 : vector<8x52xi32>
    %cst_8 = arith.constant 1.000000e+00 : f32
    %36 = vector.broadcast %cst_8 : f32 to vector<8x52xf32>
    %37 = arith.select %35, %36, %31 : vector<8x52xi1>, vector<8x52xf32>
    %38 = arith.select %33, %8, %37 : vector<8x52xi1>, vector<8x52xf32>
    %c0_9 = arith.constant 0 : index
    %c0_10 = arith.constant 0 : index
    %39 = vector.load %arg3[%c0_9, %c0_10] : memref<52x128xf32, #tpu.memory_space<vmem>>, vector<52x128xf32>
    %cst_11 = arith.constant dense<0.000000e+00> : vector<8x128xf32>
    %40 = tpu.matmul %38, %39, %cst_11 {dimension_numbers = #tpu.dot_dimension_numbers<[1], [0], [0], [1], [0, 0, 1, 1], [], []>, precision = #tpu.contract_precision<fp32>} : vector<8x52xf32>, vector<52x128xf32>, vector<8x128xf32> -> vector<8x128xf32>
    %c0_12 = arith.constant 0 : index
    %c0_13 = arith.constant 0 : index
    %41 = vector.load %arg4[%c0_12, %c0_13] : memref<8x128xf32, #tpu.memory_space<vmem>>, vector<8x128xf32>
    tpu.vector_store %arg4[%c0_12, %c0_13], %40 {strides = array<i32>} : memref<8x128xf32, #tpu.memory_space<vmem>>, vector<8x128xf32>,
    return
  }
  func.func @transform_0(%arg0: i32) -> (i32, i32) {
    %c0_i32 = arith.constant 0 : i32
    %c0_i32_0 = arith.constant 0 : i32
    return %arg0, %c0_i32 : i32, i32
  }
  func.func @transform_1(%arg0: i32) -> (i32, i32) {
    %c0_i32 = arith.constant 0 : i32
    %c0_i32_0 = arith.constant 0 : i32
    %c0_i32_1 = arith.constant 0 : i32
    return %c0_i32, %c0_i32_0 : i32, i32
  }
  func.func @transform_2(%arg0: i32) -> (i32, i32) {
    %c0_i32 = arith.constant 0 : i32
    %c0_i32_0 = arith.constant 0 : i32
    %c0_i32_1 = arith.constant 0 : i32
    return %c0_i32, %c0_i32_0 : i32, i32
  }
  func.func @transform_3(%arg0: i32) -> (i32, i32) {
    %c0_i32 = arith.constant 0 : i32
    %c0_i32_0 = arith.constant 0 : i32
    return %arg0, %c0_i32 : i32, i32
  }
}

</mosaic_0001>

<llo_original>
// kernel: tpu_custom_call.1
$region0: #{tpu_custom_call.1}
  #allocation0 [shape = 'u32[]', space=smem, size = 0x4, offset = 0x4, fixed_abs, tag = 'smem constant byte address 0x4 - core index']
  #allocation1 [shape = 'u32[144,128]{1,0:T(1,128)}', space=vmem, size = 0x12000, scoped, tag = 'internal scratch']
  %s0 = inlined_call_operand.hbm [shape: s32[8,8], index: 0, kind: input, shape index: {}]
  %s1 = inlined_call_operand.hbm [shape: f32[8,52], index: 1, kind: input, shape index: {}]
  %s2 = inlined_call_operand.hbm [shape: f32[52,128], index: 2, kind: input, shape index: {}]
  %s3 = inlined_call_operand.hbm [shape: f32[8,128], index: 3, kind: output, shape index: {}]
  %s4 = sld [smem:[#allocation0]]
  $region34: #{tpu_custom_call.1} parent=0
    _
  %s6 = ssub.s32 1, %s4
  %s7 = scalar_select 0, %s6, %s4
  $region1: #{tpu_custom_call.1} parent=0
    #allocation2 [shape = 'u8[4096]{0}', space=vmem, size = 0x1000, scoped, tag = 'input window, operand 0, single buffered']
    #allocation3 [shape = 's32[1]{0}', space=sflag, size = 0x4, scoped, tag = 'scoped memory for tpu_custom_call.1']
    #allocation4 [shape = 's32[1]{0}', space=sflag, size = 0x4, scoped, tag = 'scoped memory for tpu_custom_call.1']
    #allocation5 [shape = 'u8[4096]{0}', space=vmem, size = 0x1000, scoped, tag = 'input window, operand 1, single buffered']
    #allocation6 [shape = 's32[1]{0}', space=sflag, size = 0x4, scoped, tag = 'scoped memory for tpu_custom_call.1']
    #allocation7 [shape = 'u8[28672]{0}', space=vmem, size = 0x7000, scoped, tag = 'input window, operand 2, single buffered']
    #allocation8 [shape = 'u8[4096]{0}', space=vmem, size = 0x1000, scoped, tag = 'output window, operand 0, single buffered']
    %8 = vsyncpa [#allocation3], 0
    %9 = vsyncpa [#allocation6], 0
    %10 = vsyncpa [#allocation4], 0
    // Predicated region
    $region2: #{tpu_custom_call.1} parent=1 // pred_check
      _
    $region3: #{tpu_custom_call.1} parent=1 // pred_check_branch
      %12 = sbr.rel (0) target = $region5
    $region4: #{tpu_custom_call.1} parent=1 // pred_region
      %s14 = ssub.s32 128, 128
      %15 = vsyncadd [#allocation3], %s14
      %s17 = sshll.u32 [#allocation2], 4
      %s18 = int_to_ptr.vmem [resolvable:$true] %s17
      %20 = dma.hbm_to_vmem [thread:$0]  %s0, 128, %s18, [#allocation3]
    $region5: #{tpu_custom_call.1} parent=1 // pred_fallthru
      _
    // Predicated region
    $region6: #{tpu_custom_call.1} parent=1 // pred_check
      _
    $region7: #{tpu_custom_call.1} parent=1 // pred_check_branch
      %22 = sbr.rel (0) target = $region9
    $region8: #{tpu_custom_call.1} parent=1 // pred_region
      %s24 = ssub.s32 128, 128
      %25 = vsyncadd [#allocation6], %s24
      %s27 = sshll.u32 [#allocation5], 4
      %s28 = int_to_ptr.vmem [resolvable:$true] %s27
      %30 = dma.hbm_to_vmem [thread:$0]  %s1, 128, %s28, [#allocation6]
    $region9: #{tpu_custom_call.1} parent=1 // pred_fallthru
      _
    // Predicated region
    $region10: #{tpu_custom_call.1} parent=1 // pred_check
      _
    $region11: #{tpu_custom_call.1} parent=1 // pred_check_branch
      %32 = sbr.rel (0) target = $region13
    $region12: #{tpu_custom_call.1} parent=1 // pred_region
      %s34 = ssub.s32 896, 896
      %35 = vsyncadd [#allocation6], %s34
      %s36 = sshll.u32 [#allocation7], 4
      %s37 = int_to_ptr.vmem [resolvable:$true] %s36
      %42 = dma.hbm_to_vmem [thread:$0]  %s2, 896, %s37, [#allocation6], 128, 128, 8
    $region13: #{tpu_custom_call.1} parent=1 // pred_fallthru
      _
    // Predicated region
    $region14: #{tpu_custom_call.1} parent=1 // pred_check
      _
    $region15: #{tpu_custom_call.1} parent=1 // pred_check_branch
      %44 = sbr.rel (0) target = $region17
    $region16: #{tpu_custom_call.1} parent=1 // pred_region
      %45 = dma.done [#allocation3], 128
    $region17: #{tpu_custom_call.1} parent=1 // pred_fallthru
      _
    // Predicated region
    $region18: #{tpu_custom_call.1} parent=1 // pred_check
      _
    $region19: #{tpu_custom_call.1} parent=1 // pred_check_branch
      %47 = sbr.rel (0) target = $region21
    $region20: #{tpu_custom_call.1} parent=1 // pred_region
      %48 = dma.done [#allocation6], 128
    $region21: #{tpu_custom_call.1} parent=1 // pred_fallthru
      _
    // Predicated region
    $region22: #{tpu_custom_call.1} parent=1 // pred_check
      _
    $region23: #{tpu_custom_call.1} parent=1 // pred_check_branch
      %50 = sbr.rel (0) target = $region25
    $region24: #{tpu_custom_call.1} parent=1 // pred_region
      %51 = dma.done [#allocation6], 896
    $region25: #{tpu_custom_call.1} parent=1 // pred_fallthru
      _
    %v52 = vld [vmem:[#allocation2] sm:$0xff]
    %v53 = vlaneseq
    %v54 = vand.u32 %v53, 127
    %vm55 = vcmp.lt.s32.totalorder %v54, 4
    %v57 = vcvt.s32.f32 %v52
    %v58 = vsel %vm55, %v52, %v57
    %v59 = vld [vmem:[#allocation5] sm:$0xff]
    %vm60 = vcmask 64512
    %v62 = vsel %vm60, %v58, 0
    %64 = vmatprep.subr.mxu0 0.0
    %v65 = vand.u32 %v59, 4294901760
    %66 = vmatpush1.msra.mxu0 %v65
    %67 = vmatprep.subr.mxu0 0.0
    %68 = vmatpush1.msra.mxu0 0.0
    %69 = vmatprep.subr.mxu0 0.0
    %70 = vmatpush1.msra.mxu0 0.0
    %71 = vmatprep.subr.mxu0 0.0
    %72 = vmatpush1.msra.mxu0 0.0
    %73 = vmatprep.subr.mxu0 0.0
    %74 = vmatpush1.msra.mxu0 0.0
    %75 = vmatprep.subr.mxu0 0.0
    %76 = vmatpush1.msra.mxu0 0.0
    %77 = vmatprep.subr.mxu0 0.0
    %78 = vmatpush1.msra.mxu0 0.0
    %79 = vmatprep.subr.mxu0 0.0
    %80 = vmatpush1.msra.mxu0 0.0
    %81 = vmatprep.subr.mxu0 0.0
    %82 = vmatpush1.msra.mxu0 0.0
    %83 = vmatprep.subr.mxu0 0.0
    %84 = vmatpush1.msra.mxu0 0.0
    %85 = vmatprep.subr.mxu0 0.0
    %86 = vmatpush1.msra.mxu0 0.0
    %87 = vmatprep.subr.mxu0 0.0
    %88 = vmatpush1.msra.mxu0 0.0
    %89 = vmatprep.subr.mxu0 0.0
    %90 = vmatpush1.msra.mxu0 0.0
    %91 = vmatprep.subr.mxu0 0.0
    %92 = vmatpush1.msra.mxu0 0.0
    %93 = vmatprep.subr.mxu0 0.0
    %94 = vmatpush1.msra.mxu0 0.0
    %95 = vmatprep.subr.mxu0 0.0
    %96 = vmatpush1.msra.mxu0 0.0
    %97 = vmatprep.subr.mxu0 0.0
    %98 = vmatpush1.msra.mxu0 0.0
    %99 = vmatprep.subr.mxu0 0.0
    %100 = vmatpush1.msra.mxu0 0.0
    %101 = vmatprep.subr.mxu0 0.0
    %102 = vmatpush1.msra.mxu0 0.0
    %103 = vmatprep.subr.mxu0 0.0
    %104 = vmatpush1.msra.mxu0 0.0
    %105 = vmatprep.subr.mxu0 0.0
    %106 = vmatpush1.msra.mxu0 0.0
    %107 = vmatprep.subr.mxu0 0.0
    %108 = vmatpush1.msra.mxu0 0.0
    %109 = vmatprep.subr.mxu0 0.0
    %110 = vmatpush1.msra.mxu0 0.0
    %111 = vmatprep.subr.mxu0 0.0
    %112 = vmatpush1.msra.mxu0 0.0
    %113 = vmatprep.subr.mxu0 0.0
    %114 = vmatpush1.msra.mxu0 0.0
    %115 = vmatprep.subr.mxu0 0.0
    %116 = vmatpush1.msra.mxu0 0.0
    %117 = vmatprep.subr.mxu0 0.0
    %118 = vmatpush1.msra.mxu0 0.0
    %119 = vmatprep.subr.mxu0 0.0
    %120 = vmatpush1.msra.mxu0 0.0
    %121 = vmatprep.subr.mxu0 0.0
    %122 = vmatpush1.msra.mxu0 0.0
    %123 = vmatprep.subr.mxu0 0.0
    %124 = vmatpush1.msra.mxu0 0.0
    %125 = vmatprep.subr.mxu0 0.0
    %126 = vmatpush1.msra.mxu0 0.0
    %127 = vmatprep.subr.mxu0 0.0
    %128 = vmatpush1.msra.mxu0 0.0
    %129 = vmatprep.mubr.f32.mxu0 0.0
    %v130 = vand.u32 %v62, 4294901760
    %v131 = vsub.f32 %v62, %v130
    %v132 = vand.u32 %v131, 4294901760
    %v133 = vsub.f32 %v131, %v132
    %v134 = vand.u32 %v133, 4294901760
    %135 = vmatmul.mubr.f32.gmra.mrb[0].mxu0 %v134
    %v136 = vpop.f32.mrb[0].mxu0
    %v137 = vadd.f32 0.0, %v136
    %v138 = vpop.f32.mrb[0].mxu0
    %139 = vdwg.mxu0
    %140 = vmatprep.subr.mxu0 0.0
    %v141 = vand.u32 %v59, 4294901760
    %v142 = vsub.f32 %v59, %v141
    %v143 = vand.u32 %v142, 4294901760
    %v144 = vsub.f32 %v142, %v143
    %v145 = vand.u32 %v144, 4294901760
    %146 = vmatpush1.msra.mxu0 %v145
    %147 = vmatprep.subr.mxu0 0.0
    %148 = vmatpush1.msra.mxu0 0.0
    %149 = vmatprep.subr.mxu0 0.0
    %150 = vmatpush1.msra.mxu0 0.0
    %151 = vmatprep.subr.mxu0 0.0
    %152 = vmatpush1.msra.mxu0 0.0
    %153 = vmatprep.subr.mxu0 0.0
    %154 = vmatpush1.msra.mxu0 0.0
    %155 = vmatprep.subr.mxu0 0.0
    %156 = vmatpush1.msra.mxu0 0.0
    %157 = vmatprep.subr.mxu0 0.0
    %158 = vmatpush1.msra.mxu0 0.0
    %159 = vmatprep.subr.mxu0 0.0
    %160 = vmatpush1.msra.mxu0 0.0
    %161 = vmatprep.subr.mxu0 0.0
    %162 = vmatpush1.msra.mxu0 0.0
    %163 = vmatprep.subr.mxu0 0.0
    %164 = vmatpush1.msra.mxu0 0.0
    %165 = vmatprep.subr.mxu0 0.0
    %166 = vmatpush1.msra.mxu0 0.0
    %167 = vmatprep.subr.mxu0 0.0
    %168 = vmatpush1.msra.mxu0 0.0
    %169 = vmatprep.subr.mxu0 0.0
    %170 = vmatpush1.msra.mxu0 0.0
    %171 = vmatprep.subr.mxu0 0.0
    %172 = vmatpush1.msra.mxu0 0.0
    %173 = vmatprep.subr.mxu0 0.0
    %174 = vmatpush1.msra.mxu0 0.0
    %175 = vmatprep.subr.mxu0 0.0
    %176 = vmatpush1.msra.mxu0 0.0
    %177 = vmatprep.subr.mxu0 0.0
    %178 = vmatpush1.msra.mxu0 0.0
    %179 = vmatprep.subr.mxu0 0.0
    %180 = vmatpush1.msra.mxu0 0.0
    %181 = vmatprep.subr.mxu0 0.0
    %182 = vmatpush1.msra.mxu0 0.0
    %183 = vmatprep.subr.mxu0 0.0
    %184 = vmatpush1.msra.mxu0 0.0
    %185 = vmatprep.subr.mxu0 0.0
    %186 = vmatpush1.msra.mxu0 0.0
    %187 = vmatprep.subr.mxu0 0.0
    %188 = vmatpush1.msra.mxu0 0.0
    %189 = vmatprep.subr.mxu0 0.0
    %190 = vmatpush1.msra.mxu0 0.0
    %191 = vmatprep.subr.mxu0 0.0
    %192 = vmatpush1.msra.mxu0 0.0
    %193 = vmatprep.subr.mxu0 0.0
    %194 = vmatpush1.msra.mxu0 0.0
    %195 = vmatprep.subr.mxu0 0.0
    %196 = vmatpush1.msra.mxu0 0.0
    %197 = vmatprep.subr.mxu0 0.0
    %198 = vmatpush1.msra.mxu0 0.0
    %199 = vmatprep.subr.mxu0 0.0
    %200 = vmatpush1.msra.mxu0 0.0
    %201 = vmatprep.subr.mxu0 0.0
    %202 = vmatpush1.msra.mxu0 0.0
    %203 = vmatprep.subr.mxu0 0.0
    %204 = vmatpush1.msra.mxu0 0.0
    %205 = vmatprep.subr.mxu0 0.0
    %206 = vmatpush1.msra.mxu0 0.0
    %207 = vmatprep.subr.mxu0 0.0
    %208 = vmatpush1.msra.mxu0 0.0
    %209 = vmatprep.mubr.f32.mxu0 0.0
    %v210 = vand.u32 %v62, 4294901760
    %211 = vmatmul.mubr.f32.gmra.mrb[0].mxu0 %v210
    %v212 = vpop.f32.mrb[0].mxu0
    %v213 = vadd.f32 %v137, %v212
    %v214 = vpop.f32.mrb[0].mxu0
    %215 = vdwg.mxu0
    %216 = vmatprep.subr.mxu0 0.0
    %v217 = vand.u32 %v59, 4294901760
    %v218 = vsub.f32 %v59, %v217
    %219 = vmatpush1.msra.mxu0 %v218
    %220 = vmatprep.subr.mxu0 0.0
    %221 = vmatpush1.msra.mxu0 0.0
    %222 = vmatprep.subr.mxu0 0.0
    %223 = vmatpush1.msra.mxu0 0.0
    %224 = vmatprep.subr.mxu0 0.0
    %225 = vmatpush1.msra.mxu0 0.0
    %226 = vmatprep.subr.mxu0 0.0
    %227 = vmatpush1.msra.mxu0 0.0
    %228 = vmatprep.subr.mxu0 0.0
    %229 = vmatpush1.msra.mxu0 0.0
    %230 = vmatprep.subr.mxu0 0.0
    %231 = vmatpush1.msra.mxu0 0.0
    %232 = vmatprep.subr.mxu0 0.0
    %233 = vmatpush1.msra.mxu0 0.0
    %234 = vmatprep.subr.mxu0 0.0
    %235 = vmatpush1.msra.mxu0 0.0
    %236 = vmatprep.subr.mxu0 0.0
    %237 = vmatpush1.msra.mxu0 0.0
    %238 = vmatprep.subr.mxu0 0.0
    %239 = vmatpush1.msra.mxu0 0.0
    %240 = vmatprep.subr.mxu0 0.0
    %241 = vmatpush1.msra.mxu0 0.0
    %242 = vmatprep.subr.mxu0 0.0
    %243 = vmatpush1.msra.mxu0 0.0
    %244 = vmatprep.subr.mxu0 0.0
    %245 = vmatpush1.msra.mxu0 0.0
    %246 = vmatprep.subr.mxu0 0.0
    %247 = vmatpush1.msra.mxu0 0.0
    %248 = vmatprep.subr.mxu0 0.0
    %249 = vmatpush1.msra.mxu0 0.0
    %250 = vmatprep.subr.mxu0 0.0
    %251 = vmatpush1.msra.mxu0 0.0
    %252 = vmatprep.subr.mxu0 0.0
    %253 = vmatpush1.msra.mxu0 0.0
    %254 = vmatprep.subr.mxu0 0.0
    %255 = vmatpush1.msra.mxu0 0.0
    %256 = vmatprep.subr.mxu0 0.0
    %257 = vmatpush1.msra.mxu0 0.0
    %258 = vmatprep.subr.mxu0 0.0
    %259 = vmatpush1.msra.mxu0 0.0
    %260 = vmatprep.subr.mxu0 0.0
    %261 = vmatpush1.msra.mxu0 0.0
    %262 = vmatprep.subr.mxu0 0.0
    %263 = vmatpush1.msra.mxu0 0.0
    %264 = vmatprep.subr.mxu0 0.0
    %265 = vmatpush1.msra.mxu0 0.0
    %266 = vmatprep.subr.mxu0 0.0
    %267 = vmatpush1.msra.mxu0 0.0
    %268 = vmatprep.subr.mxu0 0.0
    %269 = vmatpush1.msra.mxu0 0.0
    %270 = vmatprep.subr.mxu0 0.0
    %271 = vmatpush1.msra.mxu0 0.0
    %272 = vmatprep.subr.mxu0 0.0
    %273 = vmatpush1.msra.mxu0 0.0
    %274 = vmatprep.subr.mxu0 0.0
    %275 = vmatpush1.msra.mxu0 0.0
    %276 = vmatprep.subr.mxu0 0.0
    %277 = vmatpush1.msra.mxu0 0.0
    %278 = vmatprep.subr.mxu0 0.0
    %279 = vmatpush1.msra.mxu0 0.0
    %280 = vmatprep.subr.mxu0 0.0
    %281 = vmatpush1.msra.mxu0 0.0
    %282 = vmatprep.mubr.f32.mxu0 0.0
    %v283 = vand.u32 %v62, 4294901760
    %v284 = vsub.f32 %v62, %v283
    %285 = vmatmul.mubr.f32.gmra.mrb[0].mxu0 %v284
    %v286 = vpop.f32.mrb[0].mxu0
    %v287 = vadd.f32 %v213, %v286
    %v288 = vpop.f32.mrb[0].mxu0
    %289 = vdwg.mxu0
    %290 = vmatprep.subr.mxu0 0.0
    %v291 = vand.u32 %v59, 4294901760
    %292 = vmatpush1.msra.mxu0 %v291
    %293 = vmatprep.subr.mxu0 0.0
    %294 = vmatpush1.msra.mxu0 0.0
    %295 = vmatprep.subr.mxu0 0.0
    %296 = vmatpush1.msra.mxu0 0.0
    %297 = vmatprep.subr.mxu0 0.0
    %298 = vmatpush1.msra.mxu0 0.0
    %299 = vmatprep.subr.mxu0 0.0
    %300 = vmatpush1.msra.mxu0 0.0
    %301 = vmatprep.subr.mxu0 0.0
    %302 = vmatpush1.msra.mxu0 0.0
    %303 = vmatprep.subr.mxu0 0.0
    %304 = vmatpush1.msra.mxu0 0.0
    %305 = vmatprep.subr.mxu0 0.0
    %306 = vmatpush1.msra.mxu0 0.0
    %307 = vmatprep.subr.mxu0 0.0
    %308 = vmatpush1.msra.mxu0 0.0
    %309 = vmatprep.subr.mxu0 0.0
    %310 = vmatpush1.msra.mxu0 0.0
    %311 = vmatprep.subr.mxu0 0.0
    %312 = vmatpush1.msra.mxu0 0.0
    %313 = vmatprep.subr.mxu0 0.0
    %314 = vmatpush1.msra.mxu0 0.0
    %315 = vmatprep.subr.mxu0 0.0
    %316 = vmatpush1.msra.mxu0 0.0
    %317 = vmatprep.subr.mxu0 0.0
    %318 = vmatpush1.msra.mxu0 0.0
    %319 = vmatprep.subr.mxu0 0.0
    %320 = vmatpush1.msra.mxu0 0.0
    %321 = vmatprep.subr.mxu0 0.0
    %322 = vmatpush1.msra.mxu0 0.0
    %323 = vmatprep.subr.mxu0 0.0
    %324 = vmatpush1.msra.mxu0 0.0
    %325 = vmatprep.subr.mxu0 0.0
    %326 = vmatpush1.msra.mxu0 0.0
    %327 = vmatprep.subr.mxu0 0.0
    %328 = vmatpush1.msra.mxu0 0.0
    %329 = vmatprep.subr.mxu0 0.0
    %330 = vmatpush1.msra.mxu0 0.0
    %331 = vmatprep.subr.mxu0 0.0
    %332 = vmatpush1.msra.mxu0 0.0
    %333 = vmatprep.subr.mxu0 0.0
    %334 = vmatpush1.msra.mxu0 0.0
    %335 = vmatprep.subr.mxu0 0.0
    %336 = vmatpush1.msra.mxu0 0.0
    %337 = vmatprep.subr.mxu0 0.0
    %338 = vmatpush1.msra.mxu0 0.0
    %339 = vmatprep.subr.mxu0 0.0
    %340 = vmatpush1.msra.mxu0 0.0
    %341 = vmatprep.subr.mxu0 0.0
    %342 = vmatpush1.msra.mxu0 0.0
    %343 = vmatprep.subr.mxu0 0.0
    %344 = vmatpush1.msra.mxu0 0.0
    %345 = vmatprep.subr.mxu0 0.0
    %346 = vmatpush1.msra.mxu0 0.0
    %347 = vmatprep.subr.mxu0 0.0
    %348 = vmatpush1.msra.mxu0 0.0
    %349 = vmatprep.subr.mxu0 0.0
    %350 = vmatpush1.msra.mxu0 0.0
    %351 = vmatprep.subr.mxu0 0.0
    %352 = vmatpush1.msra.mxu0 0.0
    %353 = vmatprep.subr.mxu0 0.0
    %354 = vmatpush1.msra.mxu0 0.0
    %355 = vmatprep.mubr.f32.mxu0 0.0
    %v356 = vand.u32 %v62, 4294901760
    %v357 = vsub.f32 %v62, %v356
    %v358 = vand.u32 %v357, 4294901760
    %359 = vmatmul.mubr.f32.gmra.mrb[0].mxu0 %v358
    %v360 = vpop.f32.mrb[0].mxu0
    %v361 = vadd.f32 %v287, %v360
    %v362 = vpop.f32.mrb[0].mxu0
    %363 = vdwg.mxu0
    %364 = vmatprep.subr.mxu0 0.0
    %v365 = vand.u32 %v59, 4294901760
    %v366 = vsub.f32 %v59, %v365
    %v367 = vand.u32 %v366, 4294901760
    %368 = vmatpush1.msra.mxu0 %v367
    %369 = vmatprep.subr.mxu0 0.0
    %370 = vmatpush1.msra.mxu0 0.0
    %371 = vmatprep.subr.mxu0 0.0
    %372 = vmatpush1.msra.mxu0 0.0
    %373 = vmatprep.subr.mxu0 0.0
    %374 = vmatpush1.msra.mxu0 0.0
    %375 = vmatprep.subr.mxu0 0.0
    %376 = vmatpush1.msra.mxu0 0.0
    %377 = vmatprep.subr.mxu0 0.0
    %378 = vmatpush1.msra.mxu0 0.0
    %379 = vmatprep.subr.mxu0 0.0
    %380 = vmatpush1.msra.mxu0 0.0
    %381 = vmatprep.subr.mxu0 0.0
    %382 = vmatpush1.msra.mxu0 0.0
    %383 = vmatprep.subr.mxu0 0.0
    %384 = vmatpush1.msra.mxu0 0.0
    %385 = vmatprep.subr.mxu0 0.0
    %386 = vmatpush1.msra.mxu0 0.0
    %387 = vmatprep.subr.mxu0 0.0
    %388 = vmatpush1.msra.mxu0 0.0
    %389 = vmatprep.subr.mxu0 0.0
    %390 = vmatpush1.msra.mxu0 0.0
    %391 = vmatprep.subr.mxu0 0.0
    %392 = vmatpush1.msra.mxu0 0.0
    %393 = vmatprep.subr.mxu0 0.0
    %394 = vmatpush1.msra.mxu0 0.0
    %395 = vmatprep.subr.mxu0 0.0
    %396 = vmatpush1.msra.mxu0 0.0
    %397 = vmatprep.subr.mxu0 0.0
    %398 = vmatpush1.msra.mxu0 0.0
    %399 = vmatprep.subr.mxu0 0.0
    %400 = vmatpush1.msra.mxu0 0.0
    %401 = vmatprep.subr.mxu0 0.0
    %402 = vmatpush1.msra.mxu0 0.0
    %403 = vmatprep.subr.mxu0 0.0
    %404 = vmatpush1.msra.mxu0 0.0
    %405 = vmatprep.subr.mxu0 0.0
    %406 = vmatpush1.msra.mxu0 0.0
    %407 = vmatprep.subr.mxu0 0.0
    %408 = vmatpush1.msra.mxu0 0.0
    %409 = vmatprep.subr.mxu0 0.0
    %410 = vmatpush1.msra.mxu0 0.0
    %411 = vmatprep.subr.mxu0 0.0
    %412 = vmatpush1.msra.mxu0 0.0
    %413 = vmatprep.subr.mxu0 0.0
    %414 = vmatpush1.msra.mxu0 0.0
    %415 = vmatprep.subr.mxu0 0.0
    %416 = vmatpush1.msra.mxu0 0.0
    %417 = vmatprep.subr.mxu0 0.0
    %418 = vmatpush1.msra.mxu0 0.0
    %419 = vmatprep.subr.mxu0 0.0
    %420 = vmatpush1.msra.mxu0 0.0
    %421 = vmatprep.subr.mxu0 0.0
    %422 = vmatpush1.msra.mxu0 0.0
    %423 = vmatprep.subr.mxu0 0.0
    %424 = vmatpush1.msra.mxu0 0.0
    %425 = vmatprep.subr.mxu0 0.0
    %426 = vmatpush1.msra.mxu0 0.0
    %427 = vmatprep.subr.mxu0 0.0
    %428 = vmatpush1.msra.mxu0 0.0
    %429 = vmatprep.subr.mxu0 0.0
    %430 = vmatpush1.msra.mxu0 0.0
    %431 = vmatprep.mubr.f32.mxu0 0.0
    %v432 = vand.u32 %v62, 4294901760
    %433 = vmatmul.mubr.f32.gmra.mrb[0].mxu0 %v432
    %v434 = vpop.f32.mrb[0].mxu0
    %v435 = vadd.f32 %v361, %v434
    %v436 = vpop.f32.mrb[0].mxu0
    %437 = vdwg.mxu0
    %438 = vmatprep.subr.mxu0 0.0
    %v439 = vand.u32 %v59, 4294901760
    %440 = vmatpush1.msra.mxu0 %v439
    %441 = vmatprep.subr.mxu0 0.0
    %442 = vmatpush1.msra.mxu0 0.0
    %443 = vmatprep.subr.mxu0 0.0
    %444 = vmatpush1.msra.mxu0 0.0
    %445 = vmatprep.subr.mxu0 0.0
    %446 = vmatpush1.msra.mxu0 0.0
    %447 = vmatprep.subr.mxu0 0.0
    %448 = vmatpush1.msra.mxu0 0.0
    %449 = vmatprep.subr.mxu0 0.0
    %450 = vmatpush1.msra.mxu0 0.0
    %451 = vmatprep.subr.mxu0 0.0
    %452 = vmatpush1.msra.mxu0 0.0
    %453 = vmatprep.subr.mxu0 0.0
    %454 = vmatpush1.msra.mxu0 0.0
    %455 = vmatprep.subr.mxu0 0.0
    %456 = vmatpush1.msra.mxu0 0.0
    %457 = vmatprep.subr.mxu0 0.0
    %458 = vmatpush1.msra.mxu0 0.0
    %459 = vmatprep.subr.mxu0 0.0
    %460 = vmatpush1.msra.mxu0 0.0
    %461 = vmatprep.subr.mxu0 0.0
    %462 = vmatpush1.msra.mxu0 0.0
    %463 = vmatprep.subr.mxu0 0.0
    %464 = vmatpush1.msra.mxu0 0.0
    %465 = vmatprep.subr.mxu0 0.0
    %466 = vmatpush1.msra.mxu0 0.0
    %467 = vmatprep.subr.mxu0 0.0
    %468 = vmatpush1.msra.mxu0 0.0
    %469 = vmatprep.subr.mxu0 0.0
    %470 = vmatpush1.msra.mxu0 0.0
    %471 = vmatprep.subr.mxu0 0.0
    %472 = vmatpush1.msra.mxu0 0.0
    %473 = vmatprep.subr.mxu0 0.0
    %474 = vmatpush1.msra.mxu0 0.0
    %475 = vmatprep.subr.mxu0 0.0
    %476 = vmatpush1.msra.mxu0 0.0
    %477 = vmatprep.subr.mxu0 0.0
    %478 = vmatpush1.msra.mxu0 0.0
    %479 = vmatprep.subr.mxu0 0.0
    %480 = vmatpush1.msra.mxu0 0.0
    %481 = vmatprep.subr.mxu0 0.0
    %482 = vmatpush1.msra.mxu0 0.0
    %483 = vmatprep.subr.mxu0 0.0
    %484 = vmatpush1.msra.mxu0 0.0
    %485 = vmatprep.subr.mxu0 0.0
    %486 = vmatpush1.msra.mxu0 0.0
    %487 = vmatprep.subr.mxu0 0.0
    %488 = vmatpush1.msra.mxu0 0.0
    %489 = vmatprep.subr.mxu0 0.0
    %490 = vmatpush1.msra.mxu0 0.0
    %491 = vmatprep.subr.mxu0 0.0
    %492 = vmatpush1.msra.mxu0 0.0
    %493 = vmatprep.subr.mxu0 0.0
    %494 = vmatpush1.msra.mxu0 0.0
    %495 = vmatprep.subr.mxu0 0.0
    %496 = vmatpush1.msra.mxu0 0.0
    %497 = vmatprep.subr.mxu0 0.0
    %498 = vmatpush1.msra.mxu0 0.0
    %499 = vmatprep.subr.mxu0 0.0
    %500 = vmatpush1.msra.mxu0 0.0
    %501 = vmatprep.subr.mxu0 0.0
    %502 = vmatpush1.msra.mxu0 0.0
    %503 = vmatprep.mubr.f32.mxu0 0.0
    %v504 = vand.u32 %v62, 4294901760
    %505 = vmatmul.mubr.f32.gmra.mrb[0].mxu0 %v504
    %v506 = vpop.f32.mrb[0].mxu0
    %v507 = vadd.f32 %v435, %v506
    %v508 = vpop.f32.mrb[0].mxu0
    %509 = vdwg.mxu0
    %vm510 = vcmp.lt.s32.totalorder %v54, 0
    %v511 = vsub.s32 0, %v54
    %v512 = vsel %vm510, %v511, %v54
    %v513 = vmul.u32.u64.compose %v512, 2643056798
    %v514 = vextract.low.u32 %v513
    %v515 = vextract.high.u32 %v513
    %v516 = vshrl.u32 %v515, 3
    %v517 = vmul.u32 %v516, 13
    %v518 = vsub.s32 %v512, %v517
    %v519 = vsub.s32 0, %v518
    %v520 = vsel %vm510, %v519, %v518
    %vm521 = vcmp.ne.s32.totalorder %v520, 0
    %vm522 = vcmp.lt.s32.totalorder %v520, 0
    %vm523 = vmand %vm522, %vm521
    %v524 = vadd.s32 %v520, 13
    %v525 = vsel %vm523, %v524, %v520
    %v526 = vsub.s32 %v525, 1
    %v527 = vcvt.s32.f32 %v526
    %vm528 = vcmp.eq.f32.partialorder %v507, %v527
    %v529 = vsel %vm528, 1, 0
    %v530 = vcvt.s32.f32 %v529
    %vm531 = vcmp.eq.s32.totalorder %v525, 0
    %vm532 = vcmp.eq.s32.totalorder %v525, 12
    %v533 = vsel %vm532, 1.0, %v530
    %v534 = vsel %vm531, %v507, %v533
    %v535 = vld [vmem:[#allocation7] sm:$0xff]
    %v536 = vld [vmem:[#allocation7 + $0x8] sm:$0xff]
    %v537 = vld [vmem:[#allocation7 + $0x10] sm:$0xff]
    %v538 = vld [vmem:[#allocation7 + $0x18] sm:$0xff]
    %v539 = vld [vmem:[#allocation7 + $0x20] sm:$0xff]
    %v540 = vld [vmem:[#allocation7 + $0x28] sm:$0xff]
    %v541 = vld [vmem:[#allocation7 + $0x30] sm:$0xf]
    %vm542 = vcmask 424960
    %v544 = vsel %vm542, %v534, 0
    %vm546 = vcmask 1043456
    %v548 = vsel %vm546, %v541, 0
    %550 = vmatprep.subr.mxu0 0.0
    %v551 = vand.u32 %v535, 4294901760
    %552 = vmatpush1.msra.mxu0 %v551
    %553 = vmatprep.subr.mxu0 0.0
    %v554 = vand.u32 %v536, 4294901760
    %555 = vmatpush1.msra.mxu0 %v554
    %556 = vmatprep.subr.mxu0 0.0
    %v557 = vand.u32 %v537, 4294901760
    %558 = vmatpush1.msra.mxu0 %v557
    %559 = vmatprep.subr.mxu0 0.0
    %v560 = vand.u32 %v538, 4294901760
    %561 = vmatpush1.msra.mxu0 %v560
    %562 = vmatprep.subr.mxu0 0.0
    %v563 = vand.u32 %v539, 4294901760
    %564 = vmatpush1.msra.mxu0 %v563
    %565 = vmatprep.subr.mxu0 0.0
    %v566 = vand.u32 %v540, 4294901760
    %567 = vmatpush1.msra.mxu0 %v566
    %568 = vmatprep.subr.mxu0 0.0
    %v569 = vand.u32 %v548, 4294901760
    %570 = vmatpush1.msra.mxu0 %v569
    %571 = vmatprep.subr.mxu0 0.0
    %572 = vmatpush1.msra.mxu0 0.0
    %573 = vmatprep.subr.mxu0 0.0
    %574 = vmatpush1.msra.mxu0 0.0
    %575 = vmatprep.subr.mxu0 0.0
    %576 = vmatpush1.msra.mxu0 0.0
    %577 = vmatprep.subr.mxu0 0.0
    %578 = vmatpush1.msra.mxu0 0.0
    %579 = vmatprep.subr.mxu0 0.0
    %580 = vmatpush1.msra.mxu0 0.0
    %581 = vmatprep.subr.mxu0 0.0
    %582 = vmatpush1.msra.mxu0 0.0
    %583 = vmatprep.subr.mxu0 0.0
    %584 = vmatpush1.msra.mxu0 0.0
    %585 = vmatprep.subr.mxu0 0.0
    %586 = vmatpush1.msra.mxu0 0.0
    %587 = vmatprep.subr.mxu0 0.0
    %588 = vmatpush1.msra.mxu0 0.0
    %589 = vmatprep.subr.mxu0 0.0
    %590 = vmatpush1.msra.mxu0 0.0
    %591 = vmatprep.subr.mxu0 0.0
    %592 = vmatpush1.msra.mxu0 0.0
    %593 = vmatprep.subr.mxu0 0.0
    %594 = vmatpush1.msra.mxu0 0.0
    %595 = vmatprep.subr.mxu0 0.0
    %596 = vmatpush1.msra.mxu0 0.0
    %597 = vmatprep.subr.mxu0 0.0
    %598 = vmatpush1.msra.mxu0 0.0
    %599 = vmatprep.subr.mxu0 0.0
    %600 = vmatpush1.msra.mxu0 0.0
    %601 = vmatprep.subr.mxu0 0.0
    %602 = vmatpush1.msra.mxu0 0.0
    %603 = vmatprep.subr.mxu0 0.0
    %604 = vmatpush1.msra.mxu0 0.0
    %605 = vmatprep.subr.mxu0 0.0
    %606 = vmatpush1.msra.mxu0 0.0
    %607 = vmatprep.subr.mxu0 0.0
    %608 = vmatpush1.msra.mxu0 0.0
    %609 = vmatprep.subr.mxu0 0.0
    %610 = vmatpush1.msra.mxu0 0.0
    %611 = vmatprep.subr.mxu0 0.0
    %612 = vmatpush1.msra.mxu0 0.0
    %613 = vmatprep.subr.mxu0 0.0
    %614 = vmatpush1.msra.mxu0 0.0
    %615 = vmatprep.subr.mxu0 0.0
    %616 = vmatpush1.msra.mxu0 0.0
    %617 = vmatprep.subr.mxu0 0.0
    %618 = vmatpush1.msra.mxu0 0.0
    %619 = vmatprep.subr.mxu0 0.0
    %620 = vmatpush1.msra.mxu0 0.0
    %621 = vmatprep.mubr.f32.mxu0 0.0
    %v622 = vand.u32 %v544, 4294901760
    %v623 = vsub.f32 %v544, %v622
    %v624 = vand.u32 %v623, 4294901760
    %v625 = vsub.f32 %v623, %v624
    %v626 = vand.u32 %v625, 4294901760
    %627 = vmatmul.mubr.f32.gmra.mrb[0].mxu0 %v626
    %v628 = vpop.f32.mrb[0].mxu0
    %v629 = vadd.f32 0.0, %v628
    %v630 = vpop.f32.mrb[0].mxu0
    %631 = vdwg.mxu0
    %632 = vmatprep.subr.mxu0 0.0
    %v633 = vand.u32 %v535, 4294901760
    %v634 = vsub.f32 %v535, %v633
    %v635 = vand.u32 %v634, 4294901760
    %v636 = vsub.f32 %v634, %v635
    %v637 = vand.u32 %v636, 4294901760
    %638 = vmatpush1.msra.mxu0 %v637
    %639 = vmatprep.subr.mxu0 0.0
    %v640 = vand.u32 %v536, 4294901760
    %v641 = vsub.f32 %v536, %v640
    %v642 = vand.u32 %v641, 4294901760
    %v643 = vsub.f32 %v641, %v642
    %v644 = vand.u32 %v643, 4294901760
    %645 = vmatpush1.msra.mxu0 %v644
    %646 = vmatprep.subr.mxu0 0.0
    %v647 = vand.u32 %v537, 4294901760
    %v648 = vsub.f32 %v537, %v647
    %v649 = vand.u32 %v648, 4294901760
    %v650 = vsub.f32 %v648, %v649
    %v651 = vand.u32 %v650, 4294901760
    %652 = vmatpush1.msra.mxu0 %v651
    %653 = vmatprep.subr.mxu0 0.0
    %v654 = vand.u32 %v538, 4294901760
    %v655 = vsub.f32 %v538, %v654
    %v656 = vand.u32 %v655, 4294901760
    %v657 = vsub.f32 %v655, %v656
    %v658 = vand.u32 %v657, 4294901760
    %659 = vmatpush1.msra.mxu0 %v658
    %660 = vmatprep.subr.mxu0 0.0
    %v661 = vand.u32 %v539, 4294901760
    %v662 = vsub.f32 %v539, %v661
    %v663 = vand.u32 %v662, 4294901760
    %v664 = vsub.f32 %v662, %v663
    %v665 = vand.u32 %v664, 4294901760
    %666 = vmatpush1.msra.mxu0 %v665
    %667 = vmatprep.subr.mxu0 0.0
    %v668 = vand.u32 %v540, 4294901760
    %v669 = vsub.f32 %v540, %v668
    %v670 = vand.u32 %v669, 4294901760
    %v671 = vsub.f32 %v669, %v670
    %v672 = vand.u32 %v671, 4294901760
    %673 = vmatpush1.msra.mxu0 %v672
    %674 = vmatprep.subr.mxu0 0.0
    %v675 = vand.u32 %v548, 4294901760
    %v676 = vsub.f32 %v548, %v675
    %v677 = vand.u32 %v676, 4294901760
    %v678 = vsub.f32 %v676, %v677
    %v679 = vand.u32 %v678, 4294901760
    %680 = vmatpush1.msra.mxu0 %v679
    %681 = vmatprep.subr.mxu0 0.0
    %682 = vmatpush1.msra.mxu0 0.0
    %683 = vmatprep.subr.mxu0 0.0
    %684 = vmatpush1.msra.mxu0 0.0
    %685 = vmatprep.subr.mxu0 0.0
    %686 = vmatpush1.msra.mxu0 0.0
    %687 = vmatprep.subr.mxu0 0.0
    %688 = vmatpush1.msra.mxu0 0.0
    %689 = vmatprep.subr.mxu0 0.0
    %690 = vmatpush1.msra.mxu0 0.0
    %691 = vmatprep.subr.mxu0 0.0
    %692 = vmatpush1.msra.mxu0 0.0
    %693 = vmatprep.subr.mxu0 0.0
    %694 = vmatpush1.msra.mxu0 0.0
    %695 = vmatprep.subr.mxu0 0.0
    %696 = vmatpush1.msra.mxu0 0.0
    %697 = vmatprep.subr.mxu0 0.0
    %698 = vmatpush1.msra.mxu0 0.0
    %699 = vmatprep.subr.mxu0 0.0
    %700 = vmatpush1.msra.mxu0 0.0
    %701 = vmatprep.subr.mxu0 0.0
    %702 = vmatpush1.msra.mxu0 0.0
    %703 = vmatprep.subr.mxu0 0.0
    %704 = vmatpush1.msra.mxu0 0.0
    %705 = vmatprep.subr.mxu0 0.0
    %706 = vmatpush1.msra.mxu0 0.0
    %707 = vmatprep.subr.mxu0 0.0
    %708 = vmatpush1.msra.mxu0 0.0
    %709 = vmatprep.subr.mxu0 0.0
    %710 = vmatpush1.msra.mxu0 0.0
    %711 = vmatprep.subr.mxu0 0.0
    %712 = vmatpush1.msra.mxu0 0.0
    %713 = vmatprep.subr.mxu0 0.0
    %714 = vmatpush1.msra.mxu0 0.0
    %715 = vmatprep.subr.mxu0 0.0
    %716 = vmatpush1.msra.mxu0 0.0
    %717 = vmatprep.subr.mxu0 0.0
    %718 = vmatpush1.msra.mxu0 0.0
    %719 = vmatprep.subr.mxu0 0.0
    %720 = vmatpush1.msra.mxu0 0.0
    %721 = vmatprep.subr.mxu0 0.0
    %722 = vmatpush1.msra.mxu0 0.0
    %723 = vmatprep.subr.mxu0 0.0
    %724 = vmatpush1.msra.mxu0 0.0
    %725 = vmatprep.subr.mxu0 0.0
    %726 = vmatpush1.msra.mxu0 0.0
    %727 = vmatprep.subr.mxu0 0.0
    %728 = vmatpush1.msra.mxu0 0.0
    %729 = vmatprep.subr.mxu0 0.0
    %730 = vmatpush1.msra.mxu0 0.0
    %731 = vmatprep.mubr.f32.mxu0 0.0
    %v732 = vand.u32 %v544, 4294901760
    %733 = vmatmul.mubr.f32.gmra.mrb[0].mxu0 %v732
    %v734 = vpop.f32.mrb[0].mxu0
    %v735 = vadd.f32 %v629, %v734
    %v736 = vpop.f32.mrb[0].mxu0
    %737 = vdwg.mxu0
    %738 = vmatprep.subr.mxu0 0.0
    %v739 = vand.u32 %v535, 4294901760
    %v740 = vsub.f32 %v535, %v739
    %741 = vmatpush1.msra.mxu0 %v740
    %742 = vmatprep.subr.mxu0 0.0
    %v743 = vand.u32 %v536, 4294901760
    %v744 = vsub.f32 %v536, %v743
    %745 = vmatpush1.msra.mxu0 %v744
    %746 = vmatprep.subr.mxu0 0.0
    %v747 = vand.u32 %v537, 4294901760
    %v748 = vsub.f32 %v537, %v747
    %749 = vmatpush1.msra.mxu0 %v748
    %750 = vmatprep.subr.mxu0 0.0
    %v751 = vand.u32 %v538, 4294901760
    %v752 = vsub.f32 %v538, %v751
    %753 = vmatpush1.msra.mxu0 %v752
    %754 = vmatprep.subr.mxu0 0.0
    %v755 = vand.u32 %v539, 4294901760
    %v756 = vsub.f32 %v539, %v755
    %757 = vmatpush1.msra.mxu0 %v756
    %758 = vmatprep.subr.mxu0 0.0
    %v759 = vand.u32 %v540, 4294901760
    %v760 = vsub.f32 %v540, %v759
    %761 = vmatpush1.msra.mxu0 %v760
    %762 = vmatprep.subr.mxu0 0.0
    %v763 = vand.u32 %v548, 4294901760
    %v764 = vsub.f32 %v548, %v763
    %765 = vmatpush1.msra.mxu0 %v764
    %766 = vmatprep.subr.mxu0 0.0
    %767 = vmatpush1.msra.mxu0 0.0
    %768 = vmatprep.subr.mxu0 0.0
    %769 = vmatpush1.msra.mxu0 0.0
    %770 = vmatprep.subr.mxu0 0.0
    %771 = vmatpush1.msra.mxu0 0.0
    %772 = vmatprep.subr.mxu0 0.0
    %773 = vmatpush1.msra.mxu0 0.0
    %774 = vmatprep.subr.mxu0 0.0
    %775 = vmatpush1.msra.mxu0 0.0
    %776 = vmatprep.subr.mxu0 0.0
    %777 = vmatpush1.msra.mxu0 0.0
    %778 = vmatprep.subr.mxu0 0.0
    %779 = vmatpush1.msra.mxu0 0.0
    %780 = vmatprep.subr.mxu0 0.0
    %781 = vmatpush1.msra.mxu0 0.0
    %782 = vmatprep.subr.mxu0 0.0
    %783 = vmatpush1.msra.mxu0 0.0
    %784 = vmatprep.subr.mxu0 0.0
    %785 = vmatpush1.msra.mxu0 0.0
    %786 = vmatprep.subr.mxu0 0.0
    %787 = vmatpush1.msra.mxu0 0.0
    %788 = vmatprep.subr.mxu0 0.0
    %789 = vmatpush1.msra.mxu0 0.0
    %790 = vmatprep.subr.mxu0 0.0
    %791 = vmatpush1.msra.mxu0 0.0
    %792 = vmatprep.subr.mxu0 0.0
    %793 = vmatpush1.msra.mxu0 0.0
    %794 = vmatprep.subr.mxu0 0.0
    %795 = vmatpush1.msra.mxu0 0.0
    %796 = vmatprep.subr.mxu0 0.0
    %797 = vmatpush1.msra.mxu0 0.0
    %798 = vmatprep.subr.mxu0 0.0
    %799 = vmatpush1.msra.mxu0 0.0
    %800 = vmatprep.subr.mxu0 0.0
    %801 = vmatpush1.msra.mxu0 0.0
    %802 = vmatprep.subr.mxu0 0.0
    %803 = vmatpush1.msra.mxu0 0.0
    %804 = vmatprep.subr.mxu0 0.0
    %805 = vmatpush1.msra.mxu0 0.0
    %806 = vmatprep.subr.mxu0 0.0
    %807 = vmatpush1.msra.mxu0 0.0
    %808 = vmatprep.subr.mxu0 0.0
    %809 = vmatpush1.msra.mxu0 0.0
    %810 = vmatprep.subr.mxu0 0.0
    %811 = vmatpush1.msra.mxu0 0.0
    %812 = vmatprep.subr.mxu0 0.0
    %813 = vmatpush1.msra.mxu0 0.0
    %814 = vmatprep.subr.mxu0 0.0
    %815 = vmatpush1.msra.mxu0 0.0
    %816 = vmatprep.mubr.f32.mxu0 0.0
    %v817 = vand.u32 %v544, 4294901760
    %v818 = vsub.f32 %v544, %v817
    %819 = vmatmul.mubr.f32.gmra.mrb[0].mxu0 %v818
    %v820 = vpop.f32.mrb[0].mxu0
    %v821 = vadd.f32 %v735, %v820
    %v822 = vpop.f32.mrb[0].mxu0
    %823 = vdwg.mxu0
    %824 = vmatprep.subr.mxu0 0.0
    %v825 = vand.u32 %v535, 4294901760
    %826 = vmatpush1.msra.mxu0 %v825
    %827 = vmatprep.subr.mxu0 0.0
    %v828 = vand.u32 %v536, 4294901760
    %829 = vmatpush1.msra.mxu0 %v828
    %830 = vmatprep.subr.mxu0 0.0
    %v831 = vand.u32 %v537, 4294901760
    %832 = vmatpush1.msra.mxu0 %v831
    %833 = vmatprep.subr.mxu0 0.0
    %v834 = vand.u32 %v538, 4294901760
    %835 = vmatpush1.msra.mxu0 %v834
    %836 = vmatprep.subr.mxu0 0.0
    %v837 = vand.u32 %v539, 4294901760
    %838 = vmatpush1.msra.mxu0 %v837
    %839 = vmatprep.subr.mxu0 0.0
    %v840 = vand.u32 %v540, 4294901760
    %841 = vmatpush1.msra.mxu0 %v840
    %842 = vmatprep.subr.mxu0 0.0
    %v843 = vand.u32 %v548, 4294901760
    %844 = vmatpush1.msra.mxu0 %v843
    %845 = vmatprep.subr.mxu0 0.0
    %846 = vmatpush1.msra.mxu0 0.0
    %847 = vmatprep.subr.mxu0 0.0
    %848 = vmatpush1.msra.mxu0 0.0
    %849 = vmatprep.subr.mxu0 0.0
    %850 = vmatpush1.msra.mxu0 0.0
    %851 = vmatprep.subr.mxu0 0.0
    %852 = vmatpush1.msra.mxu0 0.0
    %853 = vmatprep.subr.mxu0 0.0
    %854 = vmatpush1.msra.mxu0 0.0
    %855 = vmatprep.subr.mxu0 0.0
    %856 = vmatpush1.msra.mxu0 0.0
    %857 = vmatprep.subr.mxu0 0.0
    %858 = vmatpush1.msra.mxu0 0.0
    %859 = vmatprep.subr.mxu0 0.0
    %860 = vmatpush1.msra.mxu0 0.0
    %861 = vmatprep.subr.mxu0 0.0
    %862 = vmatpush1.msra.mxu0 0.0
    %863 = vmatprep.subr.mxu0 0.0
    %864 = vmatpush1.msra.mxu0 0.0
    %865 = vmatprep.subr.mxu0 0.0
    %866 = vmatpush1.msra.mxu0 0.0
    %867 = vmatprep.subr.mxu0 0.0
    %868 = vmatpush1.msra.mxu0 0.0
    %869 = vmatprep.subr.mxu0 0.0
    %870 = vmatpush1.msra.mxu0 0.0
    %871 = vmatprep.subr.mxu0 0.0
    %872 = vmatpush1.msra.mxu0 0.0
    %873 = vmatprep.subr.mxu0 0.0
    %874 = vmatpush1.msra.mxu0 0.0
    %875 = vmatprep.subr.mxu0 0.0
    %876 = vmatpush1.msra.mxu0 0.0
    %877 = vmatprep.subr.mxu0 0.0
    %878 = vmatpush1.msra.mxu0 0.0
    %879 = vmatprep.subr.mxu0 0.0
    %880 = vmatpush1.msra.mxu0 0.0
    %881 = vmatprep.subr.mxu0 0.0
    %882 = vmatpush1.msra.mxu0 0.0
    %883 = vmatprep.subr.mxu0 0.0
    %884 = vmatpush1.msra.mxu0 0.0
    %885 = vmatprep.subr.mxu0 0.0
    %886 = vmatpush1.msra.mxu0 0.0
    %887 = vmatprep.subr.mxu0 0.0
    %888 = vmatpush1.msra.mxu0 0.0
    %889 = vmatprep.subr.mxu0 0.0
    %890 = vmatpush1.msra.mxu0 0.0
    %891 = vmatprep.subr.mxu0 0.0
    %892 = vmatpush1.msra.mxu0 0.0
    %893 = vmatprep.subr.mxu0 0.0
    %894 = vmatpush1.msra.mxu0 0.0
    %895 = vmatprep.mubr.f32.mxu0 0.0
    %v896 = vand.u32 %v544, 4294901760
    %v897 = vsub.f32 %v544, %v896
    %v898 = vand.u32 %v897, 4294901760
    %899 = vmatmul.mubr.f32.gmra.mrb[0].mxu0 %v898
    %v900 = vpop.f32.mrb[0].mxu0
    %v901 = vadd.f32 %v821, %v900
    %v902 = vpop.f32.mrb[0].mxu0
    %903 = vdwg.mxu0
    %904 = vmatprep.subr.mxu0 0.0
    %v905 = vand.u32 %v535, 4294901760
    %v906 = vsub.f32 %v535, %v905
    %v907 = vand.u32 %v906, 4294901760
    %908 = vmatpush1.msra.mxu0 %v907
    %909 = vmatprep.subr.mxu0 0.0
    %v910 = vand.u32 %v536, 4294901760
    %v911 = vsub.f32 %v536, %v910
    %v912 = vand.u32 %v911, 4294901760
    %913 = vmatpush1.msra.mxu0 %v912
    %914 = vmatprep.subr.mxu0 0.0
    %v915 = vand.u32 %v537, 4294901760
    %v916 = vsub.f32 %v537, %v915
    %v917 = vand.u32 %v916, 4294901760
    %918 = vmatpush1.msra.mxu0 %v917
    %919 = vmatprep.subr.mxu0 0.0
    %v920 = vand.u32 %v538, 4294901760
    %v921 = vsub.f32 %v538, %v920
    %v922 = vand.u32 %v921, 4294901760
    %923 = vmatpush1.msra.mxu0 %v922
    %924 = vmatprep.subr.mxu0 0.0
    %v925 = vand.u32 %v539, 4294901760
    %v926 = vsub.f32 %v539, %v925
    %v927 = vand.u32 %v926, 4294901760
    %928 = vmatpush1.msra.mxu0 %v927
    %929 = vmatprep.subr.mxu0 0.0
    %v930 = vand.u32 %v540, 4294901760
    %v931 = vsub.f32 %v540, %v930
    %v932 = vand.u32 %v931, 4294901760
    %933 = vmatpush1.msra.mxu0 %v932
    %934 = vmatprep.subr.mxu0 0.0
    %v935 = vand.u32 %v548, 4294901760
    %v936 = vsub.f32 %v548, %v935
    %v937 = vand.u32 %v936, 4294901760
    %938 = vmatpush1.msra.mxu0 %v937
    %939 = vmatprep.subr.mxu0 0.0
    %940 = vmatpush1.msra.mxu0 0.0
    %941 = vmatprep.subr.mxu0 0.0
    %942 = vmatpush1.msra.mxu0 0.0
    %943 = vmatprep.subr.mxu0 0.0
    %944 = vmatpush1.msra.mxu0 0.0
    %945 = vmatprep.subr.mxu0 0.0
    %946 = vmatpush1.msra.mxu0 0.0
    %947 = vmatprep.subr.mxu0 0.0
    %948 = vmatpush1.msra.mxu0 0.0
    %949 = vmatprep.subr.mxu0 0.0
    %950 = vmatpush1.msra.mxu0 0.0
    %951 = vmatprep.subr.mxu0 0.0
    %952 = vmatpush1.msra.mxu0 0.0
    %953 = vmatprep.subr.mxu0 0.0
    %954 = vmatpush1.msra.mxu0 0.0
    %955 = vmatprep.subr.mxu0 0.0
    %956 = vmatpush1.msra.mxu0 0.0
    %957 = vmatprep.subr.mxu0 0.0
    %958 = vmatpush1.msra.mxu0 0.0
    %959 = vmatprep.subr.mxu0 0.0
    %960 = vmatpush1.msra.mxu0 0.0
    %961 = vmatprep.subr.mxu0 0.0
    %962 = vmatpush1.msra.mxu0 0.0
    %963 = vmatprep.subr.mxu0 0.0
    %964 = vmatpush1.msra.mxu0 0.0
    %965 = vmatprep.subr.mxu0 0.0
    %966 = vmatpush1.msra.mxu0 0.0
    %967 = vmatprep.subr.mxu0 0.0
    %968 = vmatpush1.msra.mxu0 0.0
    %969 = vmatprep.subr.mxu0 0.0
    %970 = vmatpush1.msra.mxu0 0.0
    %971 = vmatprep.subr.mxu0 0.0
    %972 = vmatpush1.msra.mxu0 0.0
    %973 = vmatprep.subr.mxu0 0.0
    %974 = vmatpush1.msra.mxu0 0.0
    %975 = vmatprep.subr.mxu0 0.0
    %976 = vmatpush1.msra.mxu0 0.0
    %977 = vmatprep.subr.mxu0 0.0
    %978 = vmatpush1.msra.mxu0 0.0
    %979 = vmatprep.subr.mxu0 0.0
    %980 = vmatpush1.msra.mxu0 0.0
    %981 = vmatprep.subr.mxu0 0.0
    %982 = vmatpush1.msra.mxu0 0.0
    %983 = vmatprep.subr.mxu0 0.0
    %984 = vmatpush1.msra.mxu0 0.0
    %985 = vmatprep.subr.mxu0 0.0
    %986 = vmatpush1.msra.mxu0 0.0
    %987 = vmatprep.subr.mxu0 0.0
    %988 = vmatpush1.msra.mxu0 0.0
    %989 = vmatprep.mubr.f32.mxu0 0.0
    %v990 = vand.u32 %v544, 4294901760
    %991 = vmatmul.mubr.f32.gmra.mrb[0].mxu0 %v990
    %v992 = vpop.f32.mrb[0].mxu0
    %v993 = vadd.f32 %v901, %v992
    %v994 = vpop.f32.mrb[0].mxu0
    %995 = vdwg.mxu0
    %996 = vmatprep.subr.mxu0 0.0
    %v997 = vand.u32 %v535, 4294901760
    %998 = vmatpush1.msra.mxu0 %v997
    %999 = vmatprep.subr.mxu0 0.0
    %v1000 = vand.u32 %v536, 4294901760
    %1001 = vmatpush1.msra.mxu0 %v1000
    %1002 = vmatprep.subr.mxu0 0.0
    %v1003 = vand.u32 %v537, 4294901760
    %1004 = vmatpush1.msra.mxu0 %v1003
    %1005 = vmatprep.subr.mxu0 0.0
    %v1006 = vand.u32 %v538, 4294901760
    %1007 = vmatpush1.msra.mxu0 %v1006
    %1008 = vmatprep.subr.mxu0 0.0
    %v1009 = vand.u32 %v539, 4294901760
    %1010 = vmatpush1.msra.mxu0 %v1009
    %1011 = vmatprep.subr.mxu0 0.0
    %v1012 = vand.u32 %v540, 4294901760
    %1013 = vmatpush1.msra.mxu0 %v1012
    %1014 = vmatprep.subr.mxu0 0.0
    %v1015 = vand.u32 %v548, 4294901760
    %1016 = vmatpush1.msra.mxu0 %v1015
    %1017 = vmatprep.subr.mxu0 0.0
    %1018 = vmatpush1.msra.mxu0 0.0
    %1019 = vmatprep.subr.mxu0 0.0
    %1020 = vmatpush1.msra.mxu0 0.0
    %1021 = vmatprep.subr.mxu0 0.0
    %1022 = vmatpush1.msra.mxu0 0.0
    %1023 = vmatprep.subr.mxu0 0.0
    %1024 = vmatpush1.msra.mxu0 0.0
    %1025 = vmatprep.subr.mxu0 0.0
    %1026 = vmatpush1.msra.mxu0 0.0
    %1027 = vmatprep.subr.mxu0 0.0
    %1028 = vmatpush1.msra.mxu0 0.0
    %1029 = vmatprep.subr.mxu0 0.0
    %1030 = vmatpush1.msra.mxu0 0.0
    %1031 = vmatprep.subr.mxu0 0.0
    %1032 = vmatpush1.msra.mxu0 0.0
    %1033 = vmatprep.subr.mxu0 0.0
    %1034 = vmatpush1.msra.mxu0 0.0
    %1035 = vmatprep.subr.mxu0 0.0
    %1036 = vmatpush1.msra.mxu0 0.0
    %1037 = vmatprep.subr.mxu0 0.0
    %1038 = vmatpush1.msra.mxu0 0.0
    %1039 = vmatprep.subr.mxu0 0.0
    %1040 = vmatpush1.msra.mxu0 0.0
    %1041 = vmatprep.subr.mxu0 0.0
    %1042 = vmatpush1.msra.mxu0 0.0
    %1043 = vmatprep.subr.mxu0 0.0
    %1044 = vmatpush1.msra.mxu0 0.0
    %1045 = vmatprep.subr.mxu0 0.0
    %1046 = vmatpush1.msra.mxu0 0.0
    %1047 = vmatprep.subr.mxu0 0.0
    %1048 = vmatpush1.msra.mxu0 0.0
    %1049 = vmatprep.subr.mxu0 0.0
    %1050 = vmatpush1.msra.mxu0 0.0
    %1051 = vmatprep.subr.mxu0 0.0
    %1052 = vmatpush1.msra.mxu0 0.0
    %1053 = vmatprep.subr.mxu0 0.0
    %1054 = vmatpush1.msra.mxu0 0.0
    %1055 = vmatprep.subr.mxu0 0.0
    %1056 = vmatpush1.msra.mxu0 0.0
    %1057 = vmatprep.subr.mxu0 0.0
    %1058 = vmatpush1.msra.mxu0 0.0
    %1059 = vmatprep.subr.mxu0 0.0
    %1060 = vmatpush1.msra.mxu0 0.0
    %1061 = vmatprep.subr.mxu0 0.0
    %1062 = vmatpush1.msra.mxu0 0.0
    %1063 = vmatprep.subr.mxu0 0.0
    %1064 = vmatpush1.msra.mxu0 0.0
    %1065 = vmatprep.subr.mxu0 0.0
    %1066 = vmatpush1.msra.mxu0 0.0
    %1067 = vmatprep.mubr.f32.mxu0 0.0
    %v1068 = vand.u32 %v544, 4294901760
    %1069 = vmatmul.mubr.f32.gmra.mrb[0].mxu0 %v1068
    %v1070 = vpop.f32.mrb[0].mxu0
    %v1071 = vadd.f32 %v993, %v1070
    %v1072 = vpop.f32.mrb[0].mxu0
    %1073 = vdwg.mxu0
    %1074 = vst [vmem:[#allocation8] sm:$0xff] %v1071
    // Predicated region
    $region26: #{tpu_custom_call.1} parent=1 // pred_check
      _
    $region27: #{tpu_custom_call.1} parent=1 // pred_check_branch
      %1076 = sbr.rel (0) target = $region29
    $region28: #{tpu_custom_call.1} parent=1 // pred_region
      %s1078 = ssub.s32 128, 128
      %1079 = vsyncadd [#allocation4], %s1078
      %s1081 = sshll.u32 [#allocation8], 4
      %s1082 = int_to_ptr.vmem [resolvable:$true] %s1081
      %1084 = dma.vmem_to_hbm [thread:$0]  %s1082, 128, %s3, [#allocation4]
    $region29: #{tpu_custom_call.1} parent=1 // pred_fallthru
      _
    // Predicated region
    $region30: #{tpu_custom_call.1} parent=1 // pred_check
      _
    $region31: #{tpu_custom_call.1} parent=1 // pred_check_branch
      %1086 = sbr.rel (0) target = $region33
    $region32: #{tpu_custom_call.1} parent=1 // pred_region
      %1087 = dma.done [#allocation4], 128
    $region33: #{tpu_custom_call.1} parent=1 // pred_fallthru
      _
    %1088 = vsyncpa [#allocation3], 1
    %1089 = vsyncpa [#allocation6], 1
    %1090 = vsyncpa [#allocation4], 1

</llo_original>
